<compile_context>
chip_gen: v7x
topology: tpu7x:2x2x1
jax: 0.10.0
libtpu: 0.0.40
codegen_flags: <defaults>
</compile_context>

<pallas_src>
import functools

import jax
import jax.numpy as jnp
from jax.experimental import pallas as pl
from jax.experimental.pallas import tpu as pltpu


def _ddpm_noise_kernel(sab_ref, s1m_ref, x0_ref, eta_ref, out_ref):
    """Block = (B_TILE, LANE_TILE); scales are (B_TILE, 1) columns (f32)."""
    # (B,1) f32 scales broadcast over lanes; promotes narrow inputs to f32.
    out = sab_ref[...] * x0_ref[...] + s1m_ref[...] * eta_ref[...]
    out_ref[...] = out.astype(out_ref.dtype)


def _round_up(x, m):
    return (x + m - 1) // m * m


@functools.partial(jax.jit, static_argnames=("one_step",))
def ddpm_forward(x0, t, eta, alphas, alpha_bars, one_step=False):
    """JAX/Pallas equivalent of MyDDPM.forward.

    x0, eta : (N, C, H, W)
    t       : (N,) int32 timestep indices
    """
    n, c, h, w = x0.shape

    # Glue (gather + sqrt of per-batch scalars) stays in plain JAX.
    a_bar = (alphas[t] if one_step else alpha_bars[t]).astype(jnp.float32)
    sqrt_ab = jnp.sqrt(a_bar)[:, None]           # (N, 1)
    sqrt_1mab = jnp.sqrt(1.0 - a_bar)[:, None]   # (N, 1)

    # ---- layout: lane-dense 2D slab, fill sublanes for tiny batches --------
    if n % 8 != 0 and c > 1 and (h * w) % 128 == 0:
        rows, cols = n * c, h * w
        sqrt_ab = jnp.repeat(sqrt_ab, c, axis=0)       # (N*C, 1), tiny
        sqrt_1mab = jnp.repeat(sqrt_1mab, c, axis=0)
    else:
        rows, cols = n, c * h * w

    x0_f = x0.reshape(rows, cols)     # contiguous reshape: no HBM copy
    eta_f = eta.reshape(rows, cols)

    # ---- static tiling choices (shape/dtype-based) --------------------------
    itemsize = jnp.dtype(x0.dtype).itemsize
    sublane_pack = {1: 32, 2: 16, 4: 8}.get(itemsize, 8)

    lane_tile = min(_round_up(cols, 128), 4096)        # big multiple of 128
    target_block_bytes = 4 * 1024 * 1024                # ~4 MiB per stream
    max_rows = max(1, target_block_bytes // (lane_tile * itemsize))
    if rows <= max_rows:
        b_tile = rows                                    # full-dim escape hatch
    else:
        b_tile = max(sublane_pack, (max_rows // sublane_pack) * sublane_pack)

    grid = (pl.cdiv(rows, b_tile), pl.cdiv(cols, lane_tile))

    # VMEM budget derived from the actual double-buffered footprint
    # (2 buffers x 3 big streams x block), with headroom; capped for v7x.
    block_bytes = b_tile * lane_tile * itemsize
    vmem_limit = (2 * 3 * block_bytes * 5) // 4 + (1 << 20)
    vmem_limit = max(vmem_limit, 16 * 1024 * 1024)
    vmem_limit = min(vmem_limit, 48 * 1024 * 1024)

    out = pl.pallas_call(
        _ddpm_noise_kernel,
        out_shape=jax.ShapeDtypeStruct((rows, cols), x0.dtype),
        grid=grid,
        in_specs=[
            pl.BlockSpec((b_tile, 1), lambda i, j: (i, 0)),          # sqrt(a_bar)
            pl.BlockSpec((b_tile, 1), lambda i, j: (i, 0)),          # sqrt(1-a_bar)
            pl.BlockSpec((b_tile, lane_tile), lambda i, j: (i, j)),  # x0
            pl.BlockSpec((b_tile, lane_tile), lambda i, j: (i, j)),  # eta
        ],
        out_specs=pl.BlockSpec((b_tile, lane_tile), lambda i, j: (i, j)),
        compiler_params=pltpu.CompilerParams(
            dimension_semantics=("parallel", "parallel"),
            vmem_limit_bytes=int(vmem_limit),
        ),
    )(sqrt_ab, sqrt_1mab, x0_f, eta_f)

    return out.reshape(n, c, h, w)


def make_ddpm_schedule(n_steps=200, min_beta=1e-4, max_beta=0.02):
    """Deterministic parameter setup mirroring MyDDPM.__init__."""
    betas = jnp.linspace(min_beta, max_beta, n_steps, dtype=jnp.float32)
    alphas = 1.0 - betas
    alpha_bars = jnp.cumprod(alphas)
    return betas, alphas, alpha_bars


if __name__ == "__main__":
    # TODO(synk): MyDDPM.backward delegates to an arbitrary external `network`
    # module; that network lives outside this class and is not implemented here.
    key = jax.random.PRNGKey(0)
    k_x, k_eta, k_t = jax.random.split(key, 3)

    n_steps = 200
    n, c, h, w = 2, 4, 16, 16   # small shapes consistent with (N, C, H, W)

    x0 = jax.random.normal(k_x, (n, c, h, w), dtype=jnp.float32)
    eta = jax.random.normal(k_eta, (n, c, h, w), dtype=jnp.float32)
    t = jax.random.randint(k_t, (n,), 0, n_steps, dtype=jnp.int32)

    betas, alphas, alpha_bars = make_ddpm_schedule(n_steps)

    noisy = ddpm_forward(x0, t, eta, alphas, alpha_bars, one_step=False)
    jax.block_until_ready(noisy)

    # Pure-JAX reference check (matches the PyTorch forward).
    a_bar = alpha_bars[t].reshape(n, 1, 1, 1)
    ref = jnp.sqrt(a_bar) * x0 + jnp.sqrt(1.0 - a_bar) * eta
    assert jnp.allclose(noisy, ref, atol=1e-6, rtol=1e-6), "mismatch vs reference"

    # Also exercise the one_step=True static branch.
    noisy1 = ddpm_forward(x0, t, eta, alphas, alpha_bars, one_step=True)
    jax.block_until_ready(noisy1)
    a1 = alphas[t].reshape(n, 1, 1, 1)
    ref1 = jnp.sqrt(a1) * x0 + jnp.sqrt(1.0 - a1) * eta
    assert jnp.allclose(noisy1, ref1, atol=1e-6, rtol=1e-6), "mismatch (one_step)"

    # Exercise an odd, non-dividing shape to hit the cdiv/overhang path.
    n2, c2, h2, w2 = 5, 3, 17, 19
    k2x, k2e, k2t = jax.random.split(jax.random.PRNGKey(1), 3)
    x2 = jax.random.normal(k2x, (n2, c2, h2, w2), dtype=jnp.float32)
    e2 = jax.random.normal(k2e, (n2, c2, h2, w2), dtype=jnp.float32)
    t2 = jax.random.randint(k2t, (n2,), 0, n_steps, dtype=jnp.int32)
    noisy2 = ddpm_forward(x2, t2, e2, alphas, alpha_bars, one_step=False)
    jax.block_until_ready(noisy2)
    a2 = alpha_bars[t2].reshape(n2, 1, 1, 1)
    ref2 = jnp.sqrt(a2) * x2 + jnp.sqrt(1.0 - a2) * e2
    assert jnp.allclose(noisy2, ref2, atol=1e-6, rtol=1e-6), "mismatch (odd shape)"

    print("KERNEL_OK")
</pallas_src>

<mosaic_0001>
module attributes {stable_mosaic.version = 11 : i64} {
  func.func @_ddpm_noise_kernel(%arg0: i32, %arg1: i32, %arg2: memref<8x1xf32, #tpu.memory_space<vmem>>, %arg3: memref<8x1xf32, #tpu.memory_space<vmem>>, %arg4: memref<8x256xf32, #tpu.memory_space<vmem>>, %arg5: memref<8x256xf32, #tpu.memory_space<vmem>>, %arg6: memref<8x256xf32, #tpu.memory_space<vmem>>) attributes {dimension_semantics = [#tpu.dimension_semantics<parallel>, #tpu.dimension_semantics<parallel>], iteration_bounds = array<i64: 1, 1>, scalar_prefetch = 0 : i64, scratch_operands = 0 : i64, tpu.core_type = #tpu.core_type<tc>, window_params = [{transform_indices = @transform_0, window_bounds = array<i64: 8, 1>}, {transform_indices = @transform_1, window_bounds = array<i64: 8, 1>}, {transform_indices = @transform_2, window_bounds = array<i64: 8, 256>}, {transform_indices = @transform_3, window_bounds = array<i64: 8, 256>}, {transform_indices = @transform_4, window_bounds = array<i64: 8, 256>}]} {
    %c0 = arith.constant 0 : index
    %c0_0 = arith.constant 0 : index
    %0 = vector.load %arg2[%c0, %c0_0] : memref<8x1xf32, #tpu.memory_space<vmem>>, vector<8x1xf32>
    %c0_1 = arith.constant 0 : index
    %c0_2 = arith.constant 0 : index
    %1 = vector.load %arg4[%c0_1, %c0_2] : memref<8x256xf32, #tpu.memory_space<vmem>>, vector<8x256xf32>
    %2 = vector.broadcast %0 : vector<8x1xf32> to vector<8x256xf32>
    %3 = arith.mulf %2, %1 : vector<8x256xf32>
    %c0_3 = arith.constant 0 : index
    %c0_4 = arith.constant 0 : index
    %4 = vector.load %arg3[%c0_3, %c0_4] : memref<8x1xf32, #tpu.memory_space<vmem>>, vector<8x1xf32>
    %c0_5 = arith.constant 0 : index
    %c0_6 = arith.constant 0 : index
    %5 = vector.load %arg5[%c0_5, %c0_6] : memref<8x256xf32, #tpu.memory_space<vmem>>, vector<8x256xf32>
    %6 = vector.broadcast %4 : vector<8x1xf32> to vector<8x256xf32>
    %7 = arith.mulf %6, %5 : vector<8x256xf32>
    %8 = arith.addf %3, %7 : vector<8x256xf32>
    %c0_7 = arith.constant 0 : index
    %c0_8 = arith.constant 0 : index
    %9 = vector.load %arg6[%c0_7, %c0_8] : memref<8x256xf32, #tpu.memory_space<vmem>>, vector<8x256xf32>
    tpu.vector_store %arg6[%c0_7, %c0_8], %8 {strides = array<i32>} : memref<8x256xf32, #tpu.memory_space<vmem>>, vector<8x256xf32>,
    return
  }
  func.func @transform_0(%arg0: i32, %arg1: i32) -> (i32, i32) {
    %c0_i32 = arith.constant 0 : i32
    %c0_i32_0 = arith.constant 0 : i32
    return %arg0, %c0_i32 : i32, i32
  }
  func.func @transform_1(%arg0: i32, %arg1: i32) -> (i32, i32) {
    %c0_i32 = arith.constant 0 : i32
    %c0_i32_0 = arith.constant 0 : i32
    return %arg0, %c0_i32 : i32, i32
  }
  func.func @transform_2(%arg0: i32, %arg1: i32) -> (i32, i32) {
    %c0_i32 = arith.constant 0 : i32
    return %arg0, %arg1 : i32, i32
  }
  func.func @transform_3(%arg0: i32, %arg1: i32) -> (i32, i32) {
    %c0_i32 = arith.constant 0 : i32
    return %arg0, %arg1 : i32, i32
  }
  func.func @transform_4(%arg0: i32, %arg1: i32) -> (i32, i32) {
    %c0_i32 = arith.constant 0 : i32
    return %arg0, %arg1 : i32, i32
  }
}

</mosaic_0001>

<llo_original>
// kernel: ddpm_forward.1
$region0: #{ddpm_forward.1}
  #allocation0 [shape = 'u32[]', space=smem, size = 0x4, offset = 0x4, fixed_abs, tag = 'smem constant byte address 0x4 - core index']
  #allocation1 [shape = 'u32[144,128]{1,0:T(1,128)}', space=vmem, size = 0x12000, scoped, tag = 'internal scratch']
  %s0 = inlined_call_operand.vmem [shape: f32[8,1], index: 0, kind: input, shape index: {}]
  %s1 = inlined_call_operand.vmem [shape: f32[8,1], index: 1, kind: input, shape index: {}]
  %s2 = inlined_call_operand.vmem [shape: f32[8,256], index: 2, kind: input, shape index: {}]
  %s3 = inlined_call_operand.vmem [shape: f32[8,256], index: 3, kind: input, shape index: {}]
  %s4 = inlined_call_operand.vmem [shape: f32[8,256], index: 4, kind: output, shape index: {}]
  %s5 = sld [smem:[#allocation0]]
  $region26: #{ddpm_forward.1} parent=0
    _
  %s7 = ssub.s32 1, %s5
  %s8 = scalar_select 0, %s7, %s5
  // Predicated region
  $region2: #{ddpm_forward.1} parent=0 // pred_check
    _
  $region3: #{ddpm_forward.1} parent=0 // pred_check_branch
    %10 = sbr.rel (0) target = $region5
  $region4: #{ddpm_forward.1} parent=0 // pred_region
    _
  $region5: #{ddpm_forward.1} parent=0 // pred_fallthru
    _
  // Predicated region
  $region6: #{ddpm_forward.1} parent=0 // pred_check
    _
  $region7: #{ddpm_forward.1} parent=0 // pred_check_branch
    %12 = sbr.rel (0) target = $region9
  $region8: #{ddpm_forward.1} parent=0 // pred_region
    _
  $region9: #{ddpm_forward.1} parent=0 // pred_fallthru
    _
  // Predicated region
  $region10: #{ddpm_forward.1} parent=0 // pred_check
    _
  $region11: #{ddpm_forward.1} parent=0 // pred_check_branch
    %14 = sbr.rel (0) target = $region13
  $region12: #{ddpm_forward.1} parent=0 // pred_region
    _
  $region13: #{ddpm_forward.1} parent=0 // pred_fallthru
    _
  // Predicated region
  $region14: #{ddpm_forward.1} parent=0 // pred_check
    _
  $region15: #{ddpm_forward.1} parent=0 // pred_check_branch
    %16 = sbr.rel (0) target = $region17
  $region16: #{ddpm_forward.1} parent=0 // pred_region
    _
  $region17: #{ddpm_forward.1} parent=0 // pred_fallthru
    _
  %v17 = vld [vmem:[%s0] sm:$0xff]
  %v18 = vld [vmem:[%s2] sm:$0xff]
  %v19 = vld [vmem:[%s2 + $0x8] sm:$0xff]
  %21 = vset.pattern.permute.xlu0 0
  %22 = vperm.xlu0 %21, %v17
  %v23 = vpop.permute.xlu0 %22
  %v25 = vmul.f32 %v23, %v18
  %v26 = vmul.f32 %v23, %v19
  %v27 = vld [vmem:[%s1] sm:$0xff]
  %v28 = vld [vmem:[%s3] sm:$0xff]
  %v29 = vld [vmem:[%s3 + $0x8] sm:$0xff]
  %31 = vset.pattern.permute.xlu0 0
  %32 = vperm.xlu0 %31, %v27
  %v33 = vpop.permute.xlu0 %32
  %v35 = vmul.f32 %v33, %v28
  %v36 = vmul.f32 %v33, %v29
  %v37 = vadd.f32 %v25, %v35
  %v38 = vadd.f32 %v26, %v36
  %39 = vst [vmem:[%s4] sm:$0xff] %v37
  %40 = vst [vmem:[%s4 + $0x8] sm:$0xff] %v38
  // Predicated region
  $region18: #{ddpm_forward.1} parent=0 // pred_check
    _
  $region19: #{ddpm_forward.1} parent=0 // pred_check_branch
    %42 = sbr.rel (0) target = $region21
  $region20: #{ddpm_forward.1} parent=0 // pred_region
    _
  $region21: #{ddpm_forward.1} parent=0 // pred_fallthru
    _
  // Predicated region
  $region22: #{ddpm_forward.1} parent=0 // pred_check
    _
  $region23: #{ddpm_forward.1} parent=0 // pred_check_branch
    %44 = sbr.rel (0) target = $region25
  $region24: #{ddpm_forward.1} parent=0 // pred_region
    _
  $region25: #{ddpm_forward.1} parent=0 // pred_fallthru
    _

</llo_original>
